<compile_context>
chip_gen: v5e
topology: v5e:2x2
jax: 0.10.0
libtpu: 0.0.40
codegen_flags: <defaults>
</compile_context>

<pallas_src>
import math

import jax
import jax.numpy as jnp
from jax.experimental import pallas as pl
from jax.experimental.pallas import tpu as pltpu


_TARGET_TILE_ROWS = 8192            # ~8 MiB f32 x tile per grid step
_MIN_SPLIT_ROWS = 512               # don't split for megacore below this/tile
_VMEM_LIMIT_BYTES = 56 * 1024 * 1024  # > default scoped limits, < v7x 64 MiB/TC


def _round_up(x, m):
    return ((x + m - 1) // m) * m


def _device_traits():
    """Conservative per-generation knobs derived from the device kind string."""
    try:
        kind = jax.devices()[0].device_kind.lower()
    except Exception:
        kind = ""
    # bf16 VPU/EUP exists on v6e and newer; older chips would emulate it.
    bf16_epilogue = ("v6" in kind) or ("v7" in kind) or ("7x" in kind)
    # Chips with 2 TensorCores per chip benefit from >= 2 "parallel" grid steps.
    two_tensorcores = ("v4" in kind) or ("v5p" in kind) or ("v7" in kind) or ("7x" in kind)
    return bf16_epilogue, two_tensorcores


# ----------------------------------------------------------------------------
# Pallas kernel: fused 3-layer MLP on one batch tile (matmul + bias + tanh)
# ----------------------------------------------------------------------------
def _encoder_mlp_kernel(x_ref, w1_ref, b1_ref, w2_ref, b2_ref, w3_ref, b3_ref,
                        o_ref):
    # x arrives f32 straight from HBM; cast to bf16 in VMEM just before the
    # MXU (the cast is hidden under the x-tile DMA).  f32 accumulation.
    act_dtype = w2_ref.dtype                 # bf16 on v6e/v7x, f32 on v5e
    x = x_ref[...].astype(w1_ref.dtype)
    h1 = jnp.dot(x, w1_ref[...], preferred_element_type=jnp.float32)
    h1 = jnp.tanh((h1 + b1_ref[...]).astype(act_dtype))

    h2 = jnp.dot(h1, w2_ref[...], preferred_element_type=jnp.float32)
    h2 = jnp.tanh((h2 + b2_ref[...]).astype(act_dtype))

    h3 = jnp.dot(h2, w3_ref[...], preferred_element_type=jnp.float32)
    o_ref[...] = (h3 + b3_ref[...]).astype(o_ref.dtype)


# ----------------------------------------------------------------------------
# Wrapper: batch tiling, resident weights, cost estimate
# ----------------------------------------------------------------------------
def encoder_net_forward(x, params, *, tile_rows=_TARGET_TILE_ROWS):
    """Runs EncoderNet.forward.

    x: any array whose trailing dims flatten to N (e.g. (B, m, n)).
    Returns: (B, 1, b) float32, matching PyTorch's x.view(-1, 1, N) convention.
    """
    w1, b1, w2, b2, w3, b3 = (params[k] for k in
                              ("w1", "b1", "w2", "b2", "w3", "b3"))
    N, h = w1.shape
    b_out = w3.shape[1]

    bf16_epi, two_tc = _device_traits()

    # glue: x.view(-1, 1, N) -> drop the singleton axis for the kernel.
    # x stays in its HBM dtype (f32); no standalone cast/pad pass over it.
    x2d = jnp.reshape(x, (-1, N))
    B = x2d.shape[0]

    # Pad only to the 8-row sublane granularity and only when misaligned
    # (never to a whole tile -> no padding blow-up / extra DMA for aligned B).
    b8 = _round_up(max(B, 1), 8)
    if b8 != B:
        x2d = jnp.pad(x2d, ((0, b8 - B), (0, 0)))

    # Tile selection: large tiles to amortize the ~0.35 us/step overhead,
    # but keep >= 2 grid steps on 2-TC chips so "parallel" shards across cores.
    n_tiles = pl.cdiv(b8, tile_rows)
    if two_tc and n_tiles == 1 and b8 >= 2 * _MIN_SPLIT_ROWS:
        n_tiles = 2
    tile_b = _round_up(pl.cdiv(b8, n_tiles), 8)      # multiple of 8, <= b8
    grid = (pl.cdiv(b8, tile_b),)                    # ragged last tile is OK

    # Tiny resident operands: w1 in bf16 for the MXU; epilogue weights in bf16
    # only where the vector units have native bf16 (v6e/v7x).  Biases f32.
    epi_dtype = jnp.bfloat16 if bf16_epi else jnp.float32
    w1c = w1.astype(jnp.bfloat16)
    w2c = w2.astype(epi_dtype)
    w3c = w3.astype(epi_dtype)
    b1c = b1.astype(jnp.float32)
    b2c = b2.astype(jnp.float32)
    b3c = b3.astype(jnp.float32)

    weight_bytes = sum(int(t.size) * t.dtype.itemsize
                       for t in (w1c, w2c, w3c, b1c, b2c, b3c))
    cost = pl.CostEstimate(
        flops=2 * b8 * (N * h + h * h + h * b_out),
        transcendentals=2 * b8 * h,
        bytes_accessed=b8 * N * 4 + b8 * b_out * 4 + weight_bytes,
    )

    out = pl.pallas_call(
        _encoder_mlp_kernel,
        out_shape=jax.ShapeDtypeStruct((b8, b_out), jnp.float32),
        grid=grid,
        in_specs=[
            pl.BlockSpec((tile_b, N), lambda i: (i, 0)),   # streamed x tile
            pl.BlockSpec((N, h), lambda i: (0, 0)),        # VMEM-resident weights
            pl.BlockSpec((1, h), lambda i: (0, 0)),
            pl.BlockSpec((h, h), lambda i: (0, 0)),
            pl.BlockSpec((1, h), lambda i: (0, 0)),
            pl.BlockSpec((h, b_out), lambda i: (0, 0)),
            pl.BlockSpec((1, b_out), lambda i: (0, 0)),
        ],
        out_specs=pl.BlockSpec((tile_b, b_out), lambda i: (i, 0)),
        compiler_params=pltpu.CompilerParams(
            dimension_semantics=("parallel",),             # shards over TCs
            vmem_limit_bytes=_VMEM_LIMIT_BYTES,
        ),
        cost_estimate=cost,
    )(x2d, w1c, b1c, w2c, b2c, w3c, b3c)

    # glue: drop row padding, restore the (B, 1, b) shape PyTorch returns.
    return jnp.reshape(out[:B], (B, 1, b_out))


# ----------------------------------------------------------------------------
# Deterministic parameter init (xavier_normal_ for weights, zeros for biases)
# ----------------------------------------------------------------------------
def init_encoder_params(key, m, n, b, alpha=1):
    N = m * n
    h = 16 * alpha

    def xavier_normal(k, fan_in, fan_out):
        std = math.sqrt(2.0 / (fan_in + fan_out))
        # stored as (in, out) == transpose of PyTorch's (out, in) weight
        return std * jax.random.normal(k, (fan_in, fan_out), dtype=jnp.float32)

    k1, k2, k3 = jax.random.split(key, 3)
    return {
        "w1": xavier_normal(k1, N, h),
        "b1": jnp.zeros((1, h), jnp.float32),
        "w2": xavier_normal(k2, h, h),
        "b2": jnp.zeros((1, h), jnp.float32),
        "w3": xavier_normal(k3, h, b),
        "b3": jnp.zeros((1, b), jnp.float32),
    }


# ----------------------------------------------------------------------------
# Pure-JAX f32 reference for correctness checking
# ----------------------------------------------------------------------------
def encoder_net_ref(x, params):
    N = params["w1"].shape[0]
    x2d = jnp.reshape(x, (-1, N)).astype(jnp.float32)
    h1 = jnp.tanh(x2d @ params["w1"] + params["b1"])
    h2 = jnp.tanh(h1 @ params["w2"] + params["b2"])
    h3 = h2 @ params["w3"] + params["b3"]
    return jnp.reshape(h3, (x2d.shape[0], 1, params["w3"].shape[1]))


if __name__ == "__main__":
    # Shapes consistent with the module: m=n=16 -> N=256, b=8, ALPHA=1
    m, n, b, alpha = 16, 16, 8, 1

    key = jax.random.PRNGKey(0)
    kx1, kx2, kp = jax.random.split(key, 3)
    params = init_encoder_params(kp, m, n, b, alpha)

    # Case 1: tiny batch (B=2), single full tile after sublane padding.
    x1 = jax.random.normal(kx1, (2, m, n), dtype=jnp.float32)
    out1 = jax.block_until_ready(encoder_net_forward(x1, params))
    assert out1.shape == (2, 1, b), out1.shape
    ref1 = encoder_net_ref(x1, params)
    assert jnp.allclose(out1, ref1, atol=1e-1, rtol=1e-1), \
        "mismatch vs f32 reference (case 1)"

    # Case 2: odd batch + small tile -> multi-step grid with a ragged last tile.
    x2 = jax.random.normal(kx2, (37, m, n), dtype=jnp.float32)
    out2 = jax.block_until_ready(encoder_net_forward(x2, params, tile_rows=16))
    assert out2.shape == (37, 1, b), out2.shape
    ref2 = encoder_net_ref(x2, params)
    assert jnp.allclose(out2, ref2, atol=1e-1, rtol=1e-1), \
        "mismatch vs f32 reference (case 2)"

    print("KERNEL_OK")
</pallas_src>

<mosaic_0001>
module attributes {stable_mosaic.version = 11 : i64} {
  func.func @_encoder_mlp_kernel(%arg0: i32, %arg1: memref<8x256xf32, #tpu.memory_space<vmem>>, %arg2: memref<256x16xbf16, #tpu.memory_space<vmem>>, %arg3: memref<1x16xf32, #tpu.memory_space<vmem>>, %arg4: memref<16x16xf32, #tpu.memory_space<vmem>>, %arg5: memref<1x16xf32, #tpu.memory_space<vmem>>, %arg6: memref<16x8xf32, #tpu.memory_space<vmem>>, %arg7: memref<1x8xf32, #tpu.memory_space<vmem>>, %arg8: memref<8x8xf32, #tpu.memory_space<vmem>>) attributes {dimension_semantics = [#tpu.dimension_semantics<parallel>], iteration_bounds = array<i64: 1>, scalar_prefetch = 0 : i64, scratch_operands = 0 : i64, tpu.core_type = #tpu.core_type<tc>, window_params = [{transform_indices = @transform_0, window_bounds = array<i64: 8, 256>}, {pipeline_mode = #tpu.pipeline_mode<synchronous>, transform_indices = @transform_1, window_bounds = array<i64: 256, 16>}, {pipeline_mode = #tpu.pipeline_mode<synchronous>, transform_indices = @transform_2, window_bounds = array<i64: 1, 16>}, {pipeline_mode = #tpu.pipeline_mode<synchronous>, transform_indices = @transform_3, window_bounds = array<i64: 16, 16>}, {pipeline_mode = #tpu.pipeline_mode<synchronous>, transform_indices = @transform_4, window_bounds = array<i64: 1, 16>}, {pipeline_mode = #tpu.pipeline_mode<synchronous>, transform_indices = @transform_5, window_bounds = array<i64: 16, 8>}, {pipeline_mode = #tpu.pipeline_mode<synchronous>, transform_indices = @transform_6, window_bounds = array<i64: 1, 8>}, {transform_indices = @transform_7, window_bounds = array<i64: 8, 8>}]} {
    %c0 = arith.constant 0 : index
    %c0_0 = arith.constant 0 : index
    %0 = vector.load %arg1[%c0, %c0_0] : memref<8x256xf32, #tpu.memory_space<vmem>>, vector<8x256xf32>
    %1 = arith.truncf %0 : vector<8x256xf32> to vector<8x256xbf16>
    %c0_1 = arith.constant 0 : index
    %c0_2 = arith.constant 0 : index
    %2 = vector.load %arg2[%c0_1, %c0_2] : memref<256x16xbf16, #tpu.memory_space<vmem>>, vector<256x16xbf16>
    %cst = arith.constant dense<0.000000e+00> : vector<8x16xf32>
    %3 = tpu.matmul %1, %2, %cst {dimension_numbers = #tpu.dot_dimension_numbers<[1], [0], [0], [1], [0, 0, 1, 1], [], []>} : vector<8x256xbf16>, vector<256x16xbf16>, vector<8x16xf32> -> vector<8x16xf32>
    %c0_3 = arith.constant 0 : index
    %c0_4 = arith.constant 0 : index
    %4 = vector.load %arg3[%c0_3, %c0_4] : memref<1x16xf32, #tpu.memory_space<vmem>>, vector<1x16xf32>
    %5 = vector.broadcast %4 : vector<1x16xf32> to vector<8x16xf32>
    %6 = arith.addf %3, %5 : vector<8x16xf32>
    %7 = math.tanh %6 : vector<8x16xf32>
    %c0_5 = arith.constant 0 : index
    %c0_6 = arith.constant 0 : index
    %8 = vector.load %arg4[%c0_5, %c0_6] : memref<16x16xf32, #tpu.memory_space<vmem>>, vector<16x16xf32>
    %cst_7 = arith.constant dense<0.000000e+00> : vector<8x16xf32>
    %9 = tpu.matmul %7, %8, %cst_7 {dimension_numbers = #tpu.dot_dimension_numbers<[1], [0], [0], [1], [0, 0, 1, 1], [], []>} : vector<8x16xf32>, vector<16x16xf32>, vector<8x16xf32> -> vector<8x16xf32>
    %c0_8 = arith.constant 0 : index
    %c0_9 = arith.constant 0 : index
    %10 = vector.load %arg5[%c0_8, %c0_9] : memref<1x16xf32, #tpu.memory_space<vmem>>, vector<1x16xf32>
    %11 = vector.broadcast %10 : vector<1x16xf32> to vector<8x16xf32>
    %12 = arith.addf %9, %11 : vector<8x16xf32>
    %13 = math.tanh %12 : vector<8x16xf32>
    %c0_10 = arith.constant 0 : index
    %c0_11 = arith.constant 0 : index
    %14 = vector.load %arg6[%c0_10, %c0_11] : memref<16x8xf32, #tpu.memory_space<vmem>>, vector<16x8xf32>
    %cst_12 = arith.constant dense<0.000000e+00> : vector<8x8xf32>
    %15 = tpu.matmul %13, %14, %cst_12 {dimension_numbers = #tpu.dot_dimension_numbers<[1], [0], [0], [1], [0, 0, 1, 1], [], []>} : vector<8x16xf32>, vector<16x8xf32>, vector<8x8xf32> -> vector<8x8xf32>
    %c0_13 = arith.constant 0 : index
    %c0_14 = arith.constant 0 : index
    %16 = vector.load %arg7[%c0_13, %c0_14] : memref<1x8xf32, #tpu.memory_space<vmem>>, vector<1x8xf32>
    %17 = vector.broadcast %16 : vector<1x8xf32> to vector<8x8xf32>
    %18 = arith.addf %15, %17 : vector<8x8xf32>
    %c0_15 = arith.constant 0 : index
    %c0_16 = arith.constant 0 : index
    %19 = vector.load %arg8[%c0_15, %c0_16] : memref<8x8xf32, #tpu.memory_space<vmem>>, vector<8x8xf32>
    tpu.vector_store %arg8[%c0_15, %c0_16], %18 {strides = array<i32>} : memref<8x8xf32, #tpu.memory_space<vmem>>, vector<8x8xf32>,
    return
  }
  func.func @transform_0(%arg0: i32) -> (i32, i32) {
    %c0_i32 = arith.constant 0 : i32
    %c0_i32_0 = arith.constant 0 : i32
    return %arg0, %c0_i32 : i32, i32
  }
  func.func @transform_1(%arg0: i32) -> (i32, i32) {
    %c0_i32 = arith.constant 0 : i32
    %c0_i32_0 = arith.constant 0 : i32
    %c0_i32_1 = arith.constant 0 : i32
    return %c0_i32, %c0_i32_0 : i32, i32
  }
  func.func @transform_2(%arg0: i32) -> (i32, i32) {
    %c0_i32 = arith.constant 0 : i32
    %c0_i32_0 = arith.constant 0 : i32
    %c0_i32_1 = arith.constant 0 : i32
    return %c0_i32, %c0_i32_0 : i32, i32
  }
  func.func @transform_3(%arg0: i32) -> (i32, i32) {
    %c0_i32 = arith.constant 0 : i32
    %c0_i32_0 = arith.constant 0 : i32
    %c0_i32_1 = arith.constant 0 : i32
    return %c0_i32, %c0_i32_0 : i32, i32
  }
  func.func @transform_4(%arg0: i32) -> (i32, i32) {
    %c0_i32 = arith.constant 0 : i32
    %c0_i32_0 = arith.constant 0 : i32
    %c0_i32_1 = arith.constant 0 : i32
    return %c0_i32, %c0_i32_0 : i32, i32
  }
  func.func @transform_5(%arg0: i32) -> (i32, i32) {
    %c0_i32 = arith.constant 0 : i32
    %c0_i32_0 = arith.constant 0 : i32
    %c0_i32_1 = arith.constant 0 : i32
    return %c0_i32, %c0_i32_0 : i32, i32
  }
  func.func @transform_6(%arg0: i32) -> (i32, i32) {
    %c0_i32 = arith.constant 0 : i32
    %c0_i32_0 = arith.constant 0 : i32
    %c0_i32_1 = arith.constant 0 : i32
    return %c0_i32, %c0_i32_0 : i32, i32
  }
  func.func @transform_7(%arg0: i32) -> (i32, i32) {
    %c0_i32 = arith.constant 0 : i32
    %c0_i32_0 = arith.constant 0 : i32
    return %arg0, %c0_i32 : i32, i32
  }
}

</mosaic_0001>

<llo_original>
// kernel: tpu_custom_call.1
$region0: #{tpu_custom_call.1}
  #allocation0 [shape = 'u32[]', space=smem, size = 0x4, offset = 0x4, fixed_abs, tag = 'smem constant byte address 0x4 - core index']
  #allocation1 [shape = 'u32[72,128]{1,0:T(1,128)}', space=vmem, size = 0x9000, scoped, tag = 'internal scratch']
  %s0 = inlined_call_operand.vmem [shape: f32[8,256], index: 0, kind: input, shape index: {}]
  %s1 = inlined_call_operand.vmem [shape: bf16[256,16], index: 1, kind: input, shape index: {}]
  %s2 = inlined_call_operand.vmem [shape: f32[1,16], index: 2, kind: input, shape index: {}]
  %s3 = inlined_call_operand.vmem [shape: f32[16,16], index: 3, kind: input, shape index: {}]
  %s4 = inlined_call_operand.vmem [shape: f32[1,16], index: 4, kind: input, shape index: {}]
  %s5 = inlined_call_operand.vmem [shape: f32[16,8], index: 5, kind: input, shape index: {}]
  %s6 = inlined_call_operand.vmem [shape: f32[1,8], index: 6, kind: input, shape index: {}]
  %s7 = inlined_call_operand.hbm [shape: f32[8,8], index: 7, kind: output, shape index: {}]
  %s8 = sld [smem:[#allocation0]]
  $region38: #{tpu_custom_call.1} parent=0
    _
  %s10 = ssub.s32 1, %s8
  %s11 = scalar_select 0, %s10, %s8
  $region1: #{tpu_custom_call.1} parent=0
    #allocation2 [shape = 'u8[4096]{0}', space=vmem, size = 0x1000, scoped, tag = 'output window, operand 0, single buffered']
    #allocation3 [shape = 's32[1]{0}', space=sflag, size = 0x4, scoped, tag = 'scoped memory for tpu_custom_call.1']
    %12 = vsyncpa [#allocation3], 0
    // Predicated region
    $region2: #{tpu_custom_call.1} parent=1 // pred_check
      _
    $region3: #{tpu_custom_call.1} parent=1 // pred_check_branch
      %14 = sbr.rel (0) target = $region5
    $region4: #{tpu_custom_call.1} parent=1 // pred_region
      _
    $region5: #{tpu_custom_call.1} parent=1 // pred_fallthru
      _
    // Predicated region
    $region6: #{tpu_custom_call.1} parent=1 // pred_check
      _
    $region7: #{tpu_custom_call.1} parent=1 // pred_check_branch
      %16 = sbr.rel (0) target = $region9
    $region8: #{tpu_custom_call.1} parent=1 // pred_region
      _
    $region9: #{tpu_custom_call.1} parent=1 // pred_fallthru
      _
    // Predicated region
    $region10: #{tpu_custom_call.1} parent=1 // pred_check
      _
    $region11: #{tpu_custom_call.1} parent=1 // pred_check_branch
      %18 = sbr.rel (0) target = $region13
    $region12: #{tpu_custom_call.1} parent=1 // pred_region
      _
    $region13: #{tpu_custom_call.1} parent=1 // pred_fallthru
      _
    // Predicated region
    $region14: #{tpu_custom_call.1} parent=1 // pred_check
      _
    $region15: #{tpu_custom_call.1} parent=1 // pred_check_branch
      %20 = sbr.rel (0) target = $region17
    $region16: #{tpu_custom_call.1} parent=1 // pred_region
      _
    $region17: #{tpu_custom_call.1} parent=1 // pred_fallthru
      _
    // Predicated region
    $region18: #{tpu_custom_call.1} parent=1 // pred_check
      _
    $region19: #{tpu_custom_call.1} parent=1 // pred_check_branch
      %22 = sbr.rel (0) target = $region21
    $region20: #{tpu_custom_call.1} parent=1 // pred_region
      _
    $region21: #{tpu_custom_call.1} parent=1 // pred_fallthru
      _
    // Predicated region
    $region22: #{tpu_custom_call.1} parent=1 // pred_check
      _
    $region23: #{tpu_custom_call.1} parent=1 // pred_check_branch
      %24 = sbr.rel (0) target = $region25
    $region24: #{tpu_custom_call.1} parent=1 // pred_region
      _
    $region25: #{tpu_custom_call.1} parent=1 // pred_fallthru
      _
    // Predicated region
    $region26: #{tpu_custom_call.1} parent=1 // pred_check
      _
    $region27: #{tpu_custom_call.1} parent=1 // pred_check_branch
      %26 = sbr.rel (0) target = $region29
    $region28: #{tpu_custom_call.1} parent=1 // pred_region
      _
    $region29: #{tpu_custom_call.1} parent=1 // pred_fallthru
      _
    %v27 = vld [vmem:[%s0] sm:$0xff]
    %v28 = vld [vmem:[%s0 + $0x8] sm:$0xff]
    %v29 = vpack.c.bf16 %v27, %v27
    %v30 = vpack.c.bf16 %v28, %v28
    %v31 = vld [vmem:[%s1] sm:$0xf]
    %v32 = vld [vmem:[%s1 + $0x4] sm:$0xf]
    %v33 = vld [vmem:[%s1 + $0x8] sm:$0xf]
    %v34 = vld [vmem:[%s1 + $0xc] sm:$0xf]
    %v35 = vld [vmem:[%s1 + $0x10] sm:$0xf]
    %v36 = vld [vmem:[%s1 + $0x14] sm:$0xf]
    %v37 = vld [vmem:[%s1 + $0x18] sm:$0xf]
    %v38 = vld [vmem:[%s1 + $0x1c] sm:$0xf]
    %v39 = vld [vmem:[%s1 + $0x20] sm:$0xf]
    %v40 = vld [vmem:[%s1 + $0x24] sm:$0xf]
    %v41 = vld [vmem:[%s1 + $0x28] sm:$0xf]
    %v42 = vld [vmem:[%s1 + $0x2c] sm:$0xf]
    %v43 = vld [vmem:[%s1 + $0x30] sm:$0xf]
    %v44 = vld [vmem:[%s1 + $0x34] sm:$0xf]
    %v45 = vld [vmem:[%s1 + $0x38] sm:$0xf]
    %v46 = vld [vmem:[%s1 + $0x3c] sm:$0xf]
    %v47 = vld [vmem:[%s1 + $0x40] sm:$0xf]
    %v48 = vld [vmem:[%s1 + $0x44] sm:$0xf]
    %v49 = vld [vmem:[%s1 + $0x48] sm:$0xf]
    %v50 = vld [vmem:[%s1 + $0x4c] sm:$0xf]
    %v51 = vld [vmem:[%s1 + $0x50] sm:$0xf]
    %v52 = vld [vmem:[%s1 + $0x54] sm:$0xf]
    %v53 = vld [vmem:[%s1 + $0x58] sm:$0xf]
    %v54 = vld [vmem:[%s1 + $0x5c] sm:$0xf]
    %v55 = vld [vmem:[%s1 + $0x60] sm:$0xf]
    %v56 = vld [vmem:[%s1 + $0x64] sm:$0xf]
    %v57 = vld [vmem:[%s1 + $0x68] sm:$0xf]
    %v58 = vld [vmem:[%s1 + $0x6c] sm:$0xf]
    %v59 = vld [vmem:[%s1 + $0x70] sm:$0xf]
    %v60 = vld [vmem:[%s1 + $0x74] sm:$0xf]
    %v61 = vld [vmem:[%s1 + $0x78] sm:$0xf]
    %v62 = vld [vmem:[%s1 + $0x7c] sm:$0xf]
    %v63 = vld [vmem:[%s2] sm:$0x1]
    %v65 = vperm.slane %v63, 0
    %v99 = vunpack.c.l.b16 %v31
    %v100 = vunpack.c.l.b16 %v32
    %v101 = vunpack.c.l.b16 %v33
    %v102 = vunpack.c.l.b16 %v34
    %v103 = vunpack.c.l.b16 %v35
    %v104 = vunpack.c.l.b16 %v36
    %v105 = vunpack.c.l.b16 %v37
    %v106 = vunpack.c.l.b16 %v38
    %v107 = vunpack.c.l.b16 %v39
    %v108 = vunpack.c.l.b16 %v40
    %v109 = vunpack.c.l.b16 %v41
    %v110 = vunpack.c.l.b16 %v42
    %v111 = vunpack.c.l.b16 %v43
    %v112 = vunpack.c.l.b16 %v44
    %v113 = vunpack.c.l.b16 %v45
    %v114 = vunpack.c.l.b16 %v46
    %v115 = vunpack.c.l.b16 %v47
    %v116 = vunpack.c.l.b16 %v48
    %v117 = vunpack.c.l.b16 %v49
    %v118 = vunpack.c.l.b16 %v50
    %v119 = vunpack.c.l.b16 %v51
    %v120 = vunpack.c.l.b16 %v52
    %v121 = vunpack.c.l.b16 %v53
    %v122 = vunpack.c.l.b16 %v54
    %v123 = vunpack.c.l.b16 %v55
    %v124 = vunpack.c.l.b16 %v56
    %v125 = vunpack.c.l.b16 %v57
    %v126 = vunpack.c.l.b16 %v58
    %v127 = vunpack.c.l.b16 %v59
    %v128 = vunpack.c.l.b16 %v60
    %v129 = vunpack.c.l.b16 %v61
    %v130 = vunpack.c.l.b16 %v62
    %v131 = vpack.c.b16 %v100, %v99
    %v132 = vpack.c.b16 %v102, %v101
    %v133 = vpack.c.b16 %v104, %v103
    %v134 = vpack.c.b16 %v106, %v105
    %v135 = vpack.c.b16 %v108, %v107
    %v136 = vpack.c.b16 %v110, %v109
    %v137 = vpack.c.b16 %v112, %v111
    %v138 = vpack.c.b16 %v114, %v113
    %v139 = vpack.c.b16 %v116, %v115
    %v140 = vpack.c.b16 %v118, %v117
    %v141 = vpack.c.b16 %v120, %v119
    %v142 = vpack.c.b16 %v122, %v121
    %v143 = vpack.c.b16 %v124, %v123
    %v144 = vpack.c.b16 %v126, %v125
    %v145 = vpack.c.b16 %v128, %v127
    %v146 = vpack.c.b16 %v130, %v129
    %163 = vmatpush.bf16.msra.mxu0 %v138
    %164 = vmatpush.bf16.msra.mxu0 %v137
    %165 = vmatpush.bf16.msra.mxu0 %v136
    %166 = vmatpush.bf16.msra.mxu0 %v135
    %167 = vmatpush.bf16.msra.mxu0 %v134
    %168 = vmatpush.bf16.msra.mxu0 %v133
    %169 = vmatpush.bf16.msra.mxu0 %v132
    %170 = vmatpush.bf16.msra.mxu0 %v131
    %171 = vmatmul.bf16.gmra.mxu0 %v29
    %v172 = vpop.f32.mrf.mxu0
    %v173 = vadd.f32 %v65, %v172
    %v174 = vpop.f32.mrf.mxu0
    %175 = vdwg.mxu0
    %176 = vmatpush.bf16.msra.mxu0 %v146
    %177 = vmatpush.bf16.msra.mxu0 %v145
    %178 = vmatpush.bf16.msra.mxu0 %v144
    %179 = vmatpush.bf16.msra.mxu0 %v143
    %180 = vmatpush.bf16.msra.mxu0 %v142
    %181 = vmatpush.bf16.msra.mxu0 %v141
    %182 = vmatpush.bf16.msra.mxu0 %v140
    %183 = vmatpush.bf16.msra.mxu0 %v139
    %184 = vmatmul.bf16.gmra.mxu0 %v30
    %v185 = vpop.f32.mrf.mxu0
    %v186 = vadd.f32 %v173, %v185
    %v187 = vpop.f32.mrf.mxu0
    %188 = vdwg.mxu0
    %v189 = vtanh.pop %v186
    %v190 = vld [vmem:[%s3] sm:$0xff]
    %v191 = vld [vmem:[%s3 + $0x8] sm:$0xff]
    %v192 = vld [vmem:[%s4] sm:$0x1]
    %v194 = vperm.slane %v192, 0
    %vm196 = vcmask 130048
    %v198 = vsel %vm196, %v189, 0
    %200 = vmatpush.msra.mxu0 0.0
    %201 = vmatpush.msra.mxu0 0.0
    %202 = vmatpush.msra.mxu0 0.0
    %203 = vmatpush.msra.mxu0 0.0
    %204 = vmatpush.msra.mxu0 0.0
    %205 = vmatpush.msra.mxu0 0.0
    %206 = vmatpush.msra.mxu0 0.0
    %207 = vmatpush.msra.mxu0 0.0
    %208 = vmatpush.msra.mxu0 0.0
    %209 = vmatpush.msra.mxu0 0.0
    %210 = vmatpush.msra.mxu0 0.0
    %211 = vmatpush.msra.mxu0 0.0
    %212 = vmatpush.msra.mxu0 0.0
    %213 = vmatpush.msra.mxu0 0.0
    %214 = vmatpush.msra.mxu0 %v191
    %215 = vmatpush.msra.mxu0 %v190
    %216 = vmatmul.f32.gmra.mxu0 %v198
    %v217 = vpop.f32.mrf.mxu0
    %v218 = vadd.f32 %v194, %v217
    %219 = vdwg.mxu0
    %v220 = vtanh.pop %v218
    %v221 = vld [vmem:[%s5] sm:$0xff]
    %v222 = vld [vmem:[%s5 + $0x8] sm:$0xff]
    %v223 = vld [vmem:[%s6] sm:$0x1]
    %v225 = vperm.slane %v223, 0
    %v228 = vsel %vm196, %v220, 0
    %230 = vmatpush.msra.mxu0 0.0
    %231 = vmatpush.msra.mxu0 0.0
    %232 = vmatpush.msra.mxu0 0.0
    %233 = vmatpush.msra.mxu0 0.0
    %234 = vmatpush.msra.mxu0 0.0
    %235 = vmatpush.msra.mxu0 0.0
    %236 = vmatpush.msra.mxu0 0.0
    %237 = vmatpush.msra.mxu0 0.0
    %238 = vmatpush.msra.mxu0 0.0
    %239 = vmatpush.msra.mxu0 0.0
    %240 = vmatpush.msra.mxu0 0.0
    %241 = vmatpush.msra.mxu0 0.0
    %242 = vmatpush.msra.mxu0 0.0
    %243 = vmatpush.msra.mxu0 0.0
    %244 = vmatpush.msra.mxu0 %v222
    %245 = vmatpush.msra.mxu0 %v221
    %246 = vmatmul.f32.gmra.mxu0 %v228
    %v247 = vpop.f32.mrf.mxu0
    %v248 = vadd.f32 %v225, %v247
    %249 = vdwg.mxu0
    %vm250 = vcmask 64512
    %251 = vst.msk [vmem:[#allocation2] sm:$0xff] %vm250, %v248
    // Predicated region
    $region30: #{tpu_custom_call.1} parent=1 // pred_check
      _
    $region31: #{tpu_custom_call.1} parent=1 // pred_check_branch
      %253 = sbr.rel (0) target = $region33
    $region32: #{tpu_custom_call.1} parent=1 // pred_region
      %255 = vsyncadd [#allocation3], 0
      %s257 = sshll.u32 [#allocation2], 4
      %s258 = int_to_ptr.vmem [resolvable:$true] %s257
      %s259 = sshll.u32 %s7, 4
      %s260 = int_to_ptr.hbm [resolvable:$true] %s259
      %262 = dma.vmem_to_hbm [thread:$0]  %s258, 128, %s260, [#allocation3]
    $region33: #{tpu_custom_call.1} parent=1 // pred_fallthru
      _
    // Predicated region
    $region34: #{tpu_custom_call.1} parent=1 // pred_check
      _
    $region35: #{tpu_custom_call.1} parent=1 // pred_check_branch
      %264 = sbr.rel (0) target = $region37
    $region36: #{tpu_custom_call.1} parent=1 // pred_region
      %266 = dma.done [#allocation3], 128
    $region37: #{tpu_custom_call.1} parent=1 // pred_fallthru
      _
    %267 = vsyncpa [#allocation3], 1

</llo_original>
